<compile_context>
chip_gen: v6e
topology: v6e:2x2x1
jax: 0.10.0
libtpu: 0.0.40
codegen_flags: <defaults>
</compile_context>

<pallas_src>
import functools

import numpy as np
import jax
import jax.numpy as jnp
from jax.experimental import pallas as pl
from jax.experimental.pallas import tpu as pltpu


# -------------------- NATTEN neighborhood index math (static, host-side) --------------------

def _get_window_start(index, length, kernel_size, neighborhood_size, dilation):
    if dilation <= 1:
        return max(index - neighborhood_size, 0) + (
            (index + neighborhood_size >= length)
            * (length - index - neighborhood_size - 1)
        )
    ni = index - neighborhood_size * dilation
    if ni < 0:
        return index % dilation
    if index + neighborhood_size * dilation >= length:
        imodd = index % dilation
        a = (length // dilation) * dilation
        b = length - a
        if imodd < b:
            return length - b + imodd - 2 * neighborhood_size * dilation
        return a + imodd - kernel_size * dilation
    return ni


def _get_pb_start(index, length, kernel_size, neighborhood_size, dilation):
    if dilation <= 1:
        return (
            neighborhood_size
            + (index < neighborhood_size) * (neighborhood_size - index)
            + (index + neighborhood_size >= length)
            * (length - index - 1 - neighborhood_size)
        )
    if index - neighborhood_size * dilation < 0:
        return kernel_size - 1 - (index // dilation)
    if index + neighborhood_size * dilation >= length:
        return (length - index - 1) // dilation
    return neighborhood_size


def _axis_indices(length, kernel_size, dilation):
    """Per-position neighbor indices and relative-position-bias offsets along one axis."""
    ns = kernel_size // 2
    nbr = np.empty((length, kernel_size), dtype=np.int32)
    pb = np.empty((length, kernel_size), dtype=np.int32)
    for i in range(length):
        ws = _get_window_start(i, length, kernel_size, ns, dilation)
        ps = _get_pb_start(i, length, kernel_size, ns, dilation)
        for k in range(kernel_size):
            nbr[i, k] = ws + k * dilation
            pb[i, k] = ps + k
    return nbr, pb


def _dense_axis_tables(length, kernel_size, dilation):
    """(length, length) boolean neighbor-mask and rpb-axis-index tables."""
    nbr, pb = _axis_indices(length, kernel_size, dilation)
    is_nbr = np.zeros((length, length), dtype=bool)
    pbidx = np.zeros((length, length), dtype=np.int64)
    for i in range(length):
        for k in range(kernel_size):
            j = int(nbr[i, k])
            is_nbr[i, j] = True
            pbidx[i, j] = int(pb[i, k])
    return is_nbr, pbidx


def _choose_d_tile(D, HW):
    """Depth tile so the query tile (Td*HW rows) is sublane-friendly and MXU-sized."""
    cands = [td for td in range(1, D + 1)
             if D % td == 0 and (td * HW) % 8 == 0]
    if not cands:
        return D          # single full-L tile (full-dim block is always legal)
    for td in cands:
        if td * HW >= 256:   # >=256 query rows fills the 256-wide MXU on v6e/v7x
            return td
    return cands[-1]


def _pick_row_tile(N):
    if N <= 512:
        return N
    for tm in (512, 256, 128):
        if N % tm == 0:
            return tm
    return 512            # tail block handled by Pallas OOB masking


def _vmem_limit_bytes():
    """~3/4 of physical VMEM (≈96 MiB on v5e/v6e, ≈48 MiB on v7x); safe fallback."""
    try:
        cap = pltpu.get_tpu_info().vmem_capacity_bytes
        return int(min(cap * 3 // 4, 110 * 1024 * 1024))
    except Exception:
        return 48 * 1024 * 1024


# -------------------- Pallas kernels --------------------

def _linear_kernel(x_ref, w_ref, b_ref, o_ref):
    # x: (TM, Cin), w: (Cin, Cout) bf16, b: (1, Cout) -> o: (TM, Cout)
    x = x_ref[...].astype(w_ref.dtype)          # bf16 MXU inputs, f32 accumulation
    acc = jnp.dot(x, w_ref[...], preferred_element_type=jnp.float32)
    o_ref[...] = (acc + b_ref[...].astype(jnp.float32)).astype(o_ref.dtype)


def pallas_linear(x, w, b, out_dtype, vmem_limit):
    """Row-tiled dense layer: out = x @ w + b, weights/bias VMEM-resident."""
    N, Cin = x.shape
    Cout = w.shape[1]
    tm = _pick_row_tile(N)
    return pl.pallas_call(
        _linear_kernel,
        out_shape=jax.ShapeDtypeStruct((N, Cout), out_dtype),
        grid=(pl.cdiv(N, tm),),
        in_specs=[
            pl.BlockSpec((tm, Cin), lambda i: (i, 0)),
            pl.BlockSpec((Cin, Cout), lambda i: (0, 0)),
            pl.BlockSpec((1, Cout), lambda i: (0, 0)),
        ],
        out_specs=pl.BlockSpec((tm, Cout), lambda i: (i, 0)),
        compiler_params=pltpu.CompilerParams(
            dimension_semantics=("parallel",),
            vmem_limit_bytes=vmem_limit,
        ),
    )(x, w, b.reshape(1, Cout))


def _na3d_attn_kernel(hs_ref, slot_ref, qkv_ref, bias_ref, o_ref, *,
                      num_heads, head_dim, Tq, Hsz, HW):
    # hs_ref  : SMEM (num_dt,)  halo start row offset per depth tile
    # slot_ref: SMEM (num_dt,)  bias slot per depth tile (used only by the bias index_map)
    # qkv_ref : (L, 3C)         per-batch fused qkv, VMEM-resident across depth tiles (bf16)
    # bias_ref: (nh, Tq, Hsz)   neighborhood mask (-1e9) + rpb for this tile's slot (bf16)
    # o_ref   : (Tq, C)         lane-dense output tile (all heads packed)
    del slot_ref
    C = num_heads * head_dim
    t = pl.program_id(1)
    q_start = t * Tq
    k_start = hs_ref[t]
    if HW % 8 == 0:
        q_start = pl.multiple_of(q_start, 8)
        k_start = pl.multiple_of(k_start, 8)

    # TODO(synk): for hd<=16 (or to batch heads into one MXU call) a head-batched
    #             dot_general / VPU broadcast-mul-reduce would reduce MXU fill/drain.
    for h in range(num_heads):
        c0 = h * head_dim
        # Only the needed head columns are loaded from the resident qkv block.
        qh = qkv_ref[pl.ds(q_start, Tq), c0:c0 + head_dim]               # (Tq, hd)
        kh = qkv_ref[pl.ds(k_start, Hsz), C + c0:C + c0 + head_dim]      # (Hsz, hd)
        vh = qkv_ref[pl.ds(k_start, Hsz), 2 * C + c0:2 * C + c0 + head_dim]

        # MXU: logits = q @ k^T (f32 accumulation); scale already folded into weights.
        logits = jax.lax.dot_general(
            qh, kh, (((1,), (1,)), ((), ())),
            preferred_element_type=jnp.float32)                          # (Tq, Hsz)
        logits = logits + bias_ref[h].astype(jnp.float32)

        # f32 softmax over the (masked) halo; normalize after the PV matmul.
        m = jnp.max(logits, axis=-1, keepdims=True)
        p = jnp.exp(logits - m)
        s = jnp.sum(p, axis=-1, keepdims=True)
        oh = jnp.dot(p.astype(vh.dtype), vh,
                     preferred_element_type=jnp.float32)                 # (Tq, hd)
        oh = oh * pl.reciprocal(s, approx=True)
        # direct per-head column store (no lane-relayout concat)
        o_ref[:, c0:c0 + head_dim] = oh.astype(o_ref.dtype)


def pallas_na3d_attention(qkv, bias, hs_rows, slot_tbl, *, num_heads, head_dim,
                          L, HW, Tq, Hsz, out_dtype, vmem_limit):
    B, L_in, C3 = qkv.shape
    C = num_heads * head_dim
    assert C3 == 3 * C and L_in == L
    n_uniq, nh_b, Tq_b, Hsz_b = bias.shape
    assert nh_b == num_heads and Tq_b == Tq and Hsz_b == Hsz
    num_dt = hs_rows.shape[0]
    assert L % Tq == 0 and L // Tq == num_dt

    kernel = functools.partial(
        _na3d_attn_kernel, num_heads=num_heads, head_dim=head_dim,
        Tq=Tq, Hsz=Hsz, HW=HW)

    return pl.pallas_call(
        kernel,
        out_shape=jax.ShapeDtypeStruct((B, L, C), out_dtype),
        grid_spec=pltpu.PrefetchScalarGridSpec(
            num_scalar_prefetch=2,
            grid=(B, num_dt),
            in_specs=[
                # full per-batch qkv block, resident across the depth-tile axis
                pl.BlockSpec((None, L, C3), lambda b, t, hs, sl: (b, 0, 0)),
                # deduplicated per-tile neighborhood bias (all heads); consecutive tiles
                # mapping to the same slot skip the re-DMA.
                pl.BlockSpec((None, num_heads, Tq, Hsz),
                             lambda b, t, hs, sl: (sl[t], 0, 0, 0)),
            ],
            out_specs=pl.BlockSpec((None, Tq, C), lambda b, t, hs, sl: (b, t, 0)),
        ),
        compiler_params=pltpu.CompilerParams(
            dimension_semantics=("parallel", "parallel"),
            vmem_limit_bytes=vmem_limit,
        ),
    )(hs_rows, slot_tbl, qkv, bias)
    # TODO(synk): for very large L (v7x 64 MiB VMEM), replace the per-batch resident
    #             (L, 3C) block with a manually DMA'd (Hsz, 2C) K/V halo window per step.


# -------------------- Module --------------------

class NeighborhoodAttention3D:
    def __init__(self, dim, num_heads, kernel_size, kernel_size_d=None,
                 dilation=1, dilation_d=None, bias=True, qkv_bias=True,
                 qk_scale=None, key=None):
        self.num_heads = num_heads
        self.head_dim = dim // num_heads
        self.scale = qk_scale or self.head_dim ** (-0.5)
        kernel_size_d = kernel_size_d or kernel_size
        dilation = dilation or 1
        dilation_d = dilation_d or dilation
        assert kernel_size > 1 and kernel_size % 2 == 1
        assert dilation >= 1 and dilation_d >= 1
        self.dim = dim
        self.kernel_size = kernel_size
        self.kernel_size_d = kernel_size_d
        self.dilation = dilation
        self.dilation_d = dilation_d

        key = key if key is not None else jax.random.PRNGKey(0)
        k1, k2, k3, k4, k5 = jax.random.split(key, 5)
        # weights stored as (in, out) so the kernel does x @ W directly
        self.qkv_w = jax.random.normal(k1, (dim, 3 * dim), jnp.float32) * 0.02
        self.qkv_b = (jax.random.normal(k2, (3 * dim,), jnp.float32) * 0.02
                      if qkv_bias else jnp.zeros((3 * dim,), jnp.float32))
        self.proj_w = jax.random.normal(k3, (dim, dim), jnp.float32) * 0.02
        self.proj_b = jax.random.normal(k4, (dim,), jnp.float32) * 0.02
        if bias:
            # trunc_normal_(std=0.02, a=-2, b=2)
            self.rpb = (jax.random.truncated_normal(
                k5, -2.0, 2.0,
                (num_heads, 2 * kernel_size_d - 1, 2 * kernel_size - 1, 2 * kernel_size - 1),
                jnp.float32) * 0.02)
        else:
            self.rpb = jnp.zeros(
                (num_heads, 2 * kernel_size_d - 1, 2 * kernel_size - 1, 2 * kernel_size - 1),
                jnp.float32)

        # fold the attention scale into the Q columns of the qkv projection (free at init)
        qkv_w_scaled = jnp.concatenate(
            [self.qkv_w[:, :dim] * self.scale, self.qkv_w[:, dim:]], axis=1)
        self.qkv_b_scaled = jnp.concatenate(
            [self.qkv_b[:dim] * self.scale, self.qkv_b[dim:]], axis=0)
        # bf16 MXU weights (f32 masters kept for the reference path)
        self.qkv_w_bf16 = qkv_w_scaled.astype(jnp.bfloat16)
        self.proj_w_bf16 = self.proj_w.astype(jnp.bfloat16)

        self._vmem_limit = _vmem_limit_bytes()
        self._bias_cache = {}

    # ----- precomputed tiling + neighborhood bias (mask + rpb) per geometry -----

    def _tiling_and_bias(self, D, H, W):
        cache_key = (D, H, W)
        if cache_key not in self._bias_cache:
            HW = H * W
            Td = _choose_d_tile(D, HW)
            num_dt = D // Td

            # Exact minimal depth halo per tile (handles dilation_d > 1 exactly).
            nbr_d, _ = _axis_indices(D, self.kernel_size_d, self.dilation_d)
            los, needs = [], []
            for t in range(num_dt):
                sl = nbr_d[t * Td:(t + 1) * Td]
                lo, hi = int(sl.min()), int(sl.max())
                los.append(lo)
                needs.append(hi - lo + 1)
            Hd = max(needs)                       # static halo length (max over tiles)
            hs_d = np.array([min(lo, D - Hd) for lo in los], dtype=np.int32)

            bias, slot = self._build_attn_bias(D, H, W, Td, Hd, hs_d)
            hs_rows = jnp.asarray(hs_d.astype(np.int32) * HW)     # halo start in rows
            slot_tbl = jnp.asarray(slot)
            self._bias_cache[cache_key] = (Td, Hd, hs_rows, slot_tbl, bias)
        return self._bias_cache[cache_key]

    def _build_attn_bias(self, D, H, W, Td, Hd, hs_d):
        """Deduplicated dense additive bias (n_unique, nh, Tq, Hsz): rpb inside the
        neighborhood, -1e9 outside.  Column order matches the flattened depth-halo rows."""
        Kd, K = self.kernel_size_d, self.kernel_size
        nh = self.num_heads
        HW = H * W
        num_dt = D // Td
        Tq, Hsz = Td * HW, Hd * HW
        kvol = Kd * K * K

        m_d, p_d = _dense_axis_tables(D, Kd, self.dilation_d)
        m_h, p_h = _dense_axis_tables(H, K, self.dilation)
        m_w, p_w = _dense_axis_tables(W, K, self.dilation)
        rK = 2 * K - 1
        rpb_flat = np.asarray(self.rpb, np.float32).reshape(nh, -1)

        uniq = {}
        slot = np.zeros((num_dt,), np.int32)
        blocks = []
        for t in range(num_dt):
            q0 = t * Td
            hs = int(hs_d[t])
            md = m_d[q0:q0 + Td, hs:hs + Hd]           # (Td, Hd)
            pd = p_d[q0:q0 + Td, hs:hs + Hd]
            key = (md.tobytes(), pd.tobytes())
            if key in uniq:                            # dedup identical interior tiles
                slot[t] = uniq[key]
                continue
            mask = (md[:, None, None, :, None, None]
                    & m_h[None, :, None, None, :, None]
                    & m_w[None, None, :, None, None, :])       # (Td,H,W,Hd,H,W)
            counts = mask.reshape(Tq, Hsz).sum(axis=1)
            assert int(counts.min()) == kvol and int(counts.max()) == kvol, \
                "depth halo does not cover the full neighborhood"
            pidx = (pd[:, None, None, :, None, None] * (rK * rK)
                    + p_h[None, :, None, None, :, None] * rK
                    + p_w[None, None, :, None, None, :])
            vals = rpb_flat[:, pidx.reshape(-1)].reshape(nh, Td, H, W, Hd, H, W)
            blk = np.where(mask[None], vals,
                           np.float32(-1e9)).reshape(nh, Tq, Hsz)
            uniq[key] = len(blocks)
            slot[t] = len(blocks)
            blocks.append(blk)
        # TODO(synk): for large kernel sizes, generate this bias on the fly inside the
        #             kernel (iota mask + in-kernel rpb gather) to avoid HBM traffic.
        bias = jnp.asarray(np.stack(blocks, axis=0), dtype=jnp.bfloat16)
        return bias, slot

    # ----- forward -----

    def __call__(self, x):
        B, D, H, W, C = x.shape
        assert C == self.dim
        assert D >= self.kernel_size_d * self.dilation_d
        assert H >= self.kernel_size * self.dilation
        assert W >= self.kernel_size * self.dilation
        L = D * H * W
        HW = H * W

        Td, Hd, hs_rows, slot_tbl, bias = self._tiling_and_bias(D, H, W)

        # fused qkv projection (scale folded into Q columns); bf16 weights + activations
        qkv = pallas_linear(x.reshape(B * L, C), self.qkv_w_bf16,
                            self.qkv_b_scaled, out_dtype=jnp.bfloat16,
                            vmem_limit=self._vmem_limit)
        qkv = qkv.reshape(B, L, 3 * C)

        # neighborhood attention (minimal depth halo, MXU matmuls, lane-dense output)
        out = pallas_na3d_attention(
            qkv, bias, hs_rows, slot_tbl,
            num_heads=self.num_heads, head_dim=self.head_dim,
            L=L, HW=HW, Tq=Td * HW, Hsz=Hd * HW,
            out_dtype=jnp.bfloat16, vmem_limit=self._vmem_limit)

        # output projection
        out = pallas_linear(out.reshape(B * L, C), self.proj_w_bf16, self.proj_b,
                            out_dtype=x.dtype, vmem_limit=self._vmem_limit)
        return out.reshape(B, D, H, W, C)

    # ----- pure-JAX reference (gather-based, f32) for validation -----

    def _gather_indices(self, D, H, W):
        Kd, K = self.kernel_size_d, self.kernel_size
        nbr_d, pb_d = _axis_indices(D, Kd, self.dilation_d)
        nbr_h, pb_h = _axis_indices(H, K, self.dilation)
        nbr_w, pb_w = _axis_indices(W, K, self.dilation)
        L = D * H * W
        Kvol = Kd * K * K
        idx = (nbr_d[:, None, None, :, None, None] * (H * W)
               + nbr_h[None, :, None, None, :, None] * W
               + nbr_w[None, None, :, None, None, :]).reshape(L, Kvol)
        rK = 2 * K - 1
        pbi = (pb_d[:, None, None, :, None, None] * (rK * rK)
               + pb_h[None, :, None, None, :, None] * rK
               + pb_w[None, None, :, None, None, :]).reshape(L, Kvol)
        return jnp.asarray(idx), jnp.asarray(pbi)

    def reference(self, x):
        B, D, H, W, C = x.shape
        nh, hd = self.num_heads, self.head_dim
        L = D * H * W
        xf = x.reshape(B * L, C)
        qkv = xf @ self.qkv_w + self.qkv_b
        qkv = jnp.transpose(qkv.reshape(B, L, 3, nh, hd), (2, 0, 3, 1, 4))
        q, k, v = qkv[0] * self.scale, qkv[1], qkv[2]
        idx, pbi = self._gather_indices(D, H, W)
        k_nb = k[:, :, idx, :]
        v_nb = v[:, :, idx, :]
        rpb_g = self.rpb.reshape(nh, -1)[:, pbi]
        logits = jnp.einsum('bnlc,bnlkc->bnlk', q, k_nb) + rpb_g[None]
        attn = jax.nn.softmax(logits, axis=-1)
        out = jnp.einsum('bnlk,bnlkc->bnlc', attn, v_nb)
        out = jnp.transpose(out, (0, 2, 1, 3)).reshape(B * L, C)
        out = out @ self.proj_w + self.proj_b
        return out.reshape(B, D, H, W, C)


if __name__ == "__main__":
    root = jax.random.PRNGKey(0)

    def _run_case(case_key, B, D, H, W, dim, num_heads, kernel_size, dilation):
        kx, kp = jax.random.split(case_key)
        x = jax.random.normal(kx, (B, D, H, W, dim), jnp.float32)
        mod = NeighborhoodAttention3D(dim, num_heads, kernel_size,
                                      dilation=dilation, key=kp)
        y = jax.block_until_ready(mod(x))
        y_ref = jax.block_until_ready(mod.reference(x))
        np.testing.assert_allclose(np.asarray(y), np.asarray(y_ref),
                                   rtol=2e-2, atol=2e-3)
        assert y.shape == (B, D, H, W, dim)

    key1, key2 = jax.random.split(root)
    # case 1: dense 3x3x3 neighborhood, multiple depth tiles, 2 batches, 4 heads
    _run_case(key1, B=2, D=8, H=8, W=8, dim=32, num_heads=4,
              kernel_size=3, dilation=1)
    # case 2: dilated (dilation=2) neighborhood with partial depth halos
    _run_case(key2, B=1, D=12, H=8, W=8, dim=32, num_heads=2,
              kernel_size=3, dilation=2)

    print("KERNEL_OK")
</pallas_src>

<mosaic_0001>
module attributes {stable_mosaic.version = 11 : i64} {
  func.func @_linear_kernel(%arg0: i32, %arg1: memref<512x32xf32, #tpu.memory_space<vmem>>, %arg2: memref<32x96xbf16, #tpu.memory_space<vmem>>, %arg3: memref<1x96xf32, #tpu.memory_space<vmem>>, %arg4: memref<512x96xbf16, #tpu.memory_space<vmem>>) attributes {dimension_semantics = [#tpu.dimension_semantics<parallel>], iteration_bounds = array<i64: 2>, scalar_prefetch = 0 : i64, scratch_operands = 0 : i64, tpu.core_type = #tpu.core_type<tc>, window_params = [{transform_indices = @transform_0, window_bounds = array<i64: 512, 32>}, {pipeline_mode = #tpu.pipeline_mode<synchronous>, transform_indices = @transform_1, window_bounds = array<i64: 32, 96>}, {pipeline_mode = #tpu.pipeline_mode<synchronous>, transform_indices = @transform_2, window_bounds = array<i64: 1, 96>}, {transform_indices = @transform_3, window_bounds = array<i64: 512, 96>}]} {
    %c0 = arith.constant 0 : index
    %c0_0 = arith.constant 0 : index
    %0 = vector.load %arg1[%c0, %c0_0] : memref<512x32xf32, #tpu.memory_space<vmem>>, vector<512x32xf32>
    %1 = arith.truncf %0 : vector<512x32xf32> to vector<512x32xbf16>
    %c0_1 = arith.constant 0 : index
    %c0_2 = arith.constant 0 : index
    %2 = vector.load %arg2[%c0_1, %c0_2] : memref<32x96xbf16, #tpu.memory_space<vmem>>, vector<32x96xbf16>
    %cst = arith.constant dense<0.000000e+00> : vector<512x96xf32>
    %3 = tpu.matmul %1, %2, %cst {dimension_numbers = #tpu.dot_dimension_numbers<[1], [0], [0], [1], [0, 0, 1, 1], [], []>} : vector<512x32xbf16>, vector<32x96xbf16>, vector<512x96xf32> -> vector<512x96xf32>
    %c0_3 = arith.constant 0 : index
    %c0_4 = arith.constant 0 : index
    %4 = vector.load %arg3[%c0_3, %c0_4] : memref<1x96xf32, #tpu.memory_space<vmem>>, vector<1x96xf32>
    %5 = vector.broadcast %4 : vector<1x96xf32> to vector<512x96xf32>
    %6 = arith.addf %3, %5 : vector<512x96xf32>
    %7 = arith.truncf %6 : vector<512x96xf32> to vector<512x96xbf16>
    %c0_5 = arith.constant 0 : index
    %c0_6 = arith.constant 0 : index
    %8 = vector.load %arg4[%c0_5, %c0_6] : memref<512x96xbf16, #tpu.memory_space<vmem>>, vector<512x96xbf16>
    tpu.vector_store %arg4[%c0_5, %c0_6], %7 {strides = array<i32>} : memref<512x96xbf16, #tpu.memory_space<vmem>>, vector<512x96xbf16>,
    return
  }
  func.func @transform_0(%arg0: i32) -> (i32, i32) {
    %c0_i32 = arith.constant 0 : i32
    %c0_i32_0 = arith.constant 0 : i32
    return %arg0, %c0_i32 : i32, i32
  }
  func.func @transform_1(%arg0: i32) -> (i32, i32) {
    %c0_i32 = arith.constant 0 : i32
    %c0_i32_0 = arith.constant 0 : i32
    %c0_i32_1 = arith.constant 0 : i32
    return %c0_i32, %c0_i32_0 : i32, i32
  }
  func.func @transform_2(%arg0: i32) -> (i32, i32) {
    %c0_i32 = arith.constant 0 : i32
    %c0_i32_0 = arith.constant 0 : i32
    %c0_i32_1 = arith.constant 0 : i32
    return %c0_i32, %c0_i32_0 : i32, i32
  }
  func.func @transform_3(%arg0: i32) -> (i32, i32) {
    %c0_i32 = arith.constant 0 : i32
    %c0_i32_0 = arith.constant 0 : i32
    return %arg0, %c0_i32 : i32, i32
  }
}

</mosaic_0001>

<llo_original>
// kernel: tpu_custom_call.1
$region0: #{tpu_custom_call.1}
  #allocation0 [shape = 'u32[]', space=smem, size = 0x4, offset = 0x4, fixed_abs, tag = 'smem constant byte address 0x4 - core index']
  #allocation1 [shape = 'u32[144,128]{1,0:T(1,128)}', space=vmem, size = 0x12000, scoped, tag = 'internal scratch']
  %s0 = inlined_call_operand.vmem [shape: f32[1024,32], index: 0, kind: input, shape index: {}]
  %s1 = inlined_call_operand.vmem [shape: bf16[32,96], index: 1, kind: input, shape index: {}]
  %s2 = inlined_call_operand.vmem [shape: f32[1,96], index: 2, kind: input, shape index: {}]
  %s3 = inlined_call_operand.vmem [shape: bf16[1024,96], index: 3, kind: output, shape index: {}]
  %s4 = sld [smem:[#allocation0]]
  $region45: #{tpu_custom_call.1} parent=0
    _
  %s6 = ssub.s32 1, %s4
  %s7 = scalar_select 0, %s6, %s4
  loop: start=0, step=1, limit=4
  $region2: #{tpu_custom_call.1} parent=0 // loop_pre_header
    _
  $region3: #{tpu_custom_call.1} parent=0 // loop_header
    %s9 = sphi 0, %s13
    %p10 = scmp.ge.s32.totalorder %s9, 4
    %s19 = sphi 0, %s21
    %s22 = sphi 0, %s19
    %s23 = sphi 0, %s22
    %s39 = sphi 0, %s23
    %s43 = sphi 0, %s43
    %s45 = sphi 0, %s43
    %s46 = sphi 0, %s45
    %s60 = sphi 0, %s46
    %s64 = sphi 0, %s64
    %s66 = sphi 0, %s64
    %s67 = sphi 0, %s66
    %s81 = sphi 0, %s67
    %s87 = sphi 0, %s89
    %s90 = sphi 0, %s87
    %s91 = sphi 0, %s90
    %s107 = sphi 0, %s91
  $region4: #{tpu_custom_call.1} parent=0 // loop_header_branch
    %12 = sbr.rel (%p10) target = $region8
  $region5: #{tpu_custom_call.1} parent=0 // loop_body
    %s14 = ssub.s32 %s9, 1
    %s15 = ssub.s32 %s9, 2
    %s16 = sadd.s32 %s9, 1
    %s17 = ssub.s32 %s9, %s16
    %p18 = scmp.eq.s32.totalorder %s17, 0
    %s20 = sadd.s32 %s19, 1
    %s21 = scalar_select %p18, %s19, %s20
    %p24 = pneg %p18
    %p25 = scmp.eq.s32.totalorder %s9, 1
    %p26 = por %p24, %p25
    %p27 = scmp.ne.s32.totalorder %s19, %s22
    %p28 = scmp.eq.s32.totalorder %s9, 0
    %p29 = por %p27, %p28
    %p30 = scmp.ne.s32.totalorder %s19, %s22
    %p31 = scmp.eq.s32.totalorder %s14, 1
    %p32 = por %p30, %p31
    %p33 = scmp.ne.s32.totalorder %s22, %s23
    %p34 = scmp.eq.s32.totalorder %s14, 0
    %p35 = por %p33, %p34
    %p36 = scmp.ne.s32.totalorder %s22, %s23
    %p37 = scmp.eq.s32.totalorder %s15, 1
    %p38 = por %p36, %p37
    %p40 = scmp.ne.s32.totalorder %s23, %s39
    %p41 = scmp.eq.s32.totalorder %s15, 0
    %p42 = por %p40, %p41
    %s44 = sadd.s32 %s43, 1
    %p47 = scmp.eq.s32.totalorder %s9, 1
    %p48 = scmp.ne.s32.totalorder %s43, %s45
    %p49 = scmp.eq.s32.totalorder %s9, 0
    %p50 = por %p48, %p49
    %p51 = scmp.ne.s32.totalorder %s43, %s45
    %p52 = scmp.eq.s32.totalorder %s14, 1
    %p53 = por %p51, %p52
    %p54 = scmp.ne.s32.totalorder %s45, %s46
    %p55 = scmp.eq.s32.totalorder %s14, 0
    %p56 = por %p54, %p55
    %p57 = scmp.ne.s32.totalorder %s45, %s46
    %p58 = scmp.eq.s32.totalorder %s15, 1
    %p59 = por %p57, %p58
    %p61 = scmp.ne.s32.totalorder %s46, %s60
    %p62 = scmp.eq.s32.totalorder %s15, 0
    %p63 = por %p61, %p62
    %s65 = sadd.s32 %s64, 1
    %p68 = scmp.eq.s32.totalorder %s9, 1
    %p69 = scmp.ne.s32.totalorder %s64, %s66
    %p70 = scmp.eq.s32.totalorder %s9, 0
    %p71 = por %p69, %p70
    %p72 = scmp.ne.s32.totalorder %s64, %s66
    %p73 = scmp.eq.s32.totalorder %s14, 1
    %p74 = por %p72, %p73
    %p75 = scmp.ne.s32.totalorder %s66, %s67
    %p76 = scmp.eq.s32.totalorder %s14, 0
    %p77 = por %p75, %p76
    %p78 = scmp.ne.s32.totalorder %s66, %s67
    %p79 = scmp.eq.s32.totalorder %s15, 1
    %p80 = por %p78, %p79
    %p82 = scmp.ne.s32.totalorder %s67, %s81
    %p83 = scmp.eq.s32.totalorder %s15, 0
    %p84 = por %p82, %p83
    %s85 = ssub.s32 %s9, %s16
    %p86 = scmp.eq.s32.totalorder %s85, 0
    %s88 = sadd.s32 %s87, 1
    %s89 = scalar_select %p86, %s87, %s88
    %p92 = pneg %p86
    %p93 = scmp.eq.s32.totalorder %s9, 1
    %p94 = por %p92, %p93
    %p95 = scmp.ne.s32.totalorder %s87, %s90
    %p96 = scmp.eq.s32.totalorder %s9, 0
    %p97 = por %p95, %p96
    %p98 = scmp.ne.s32.totalorder %s87, %s90
    %p99 = scmp.eq.s32.totalorder %s14, 1
    %p100 = por %p98, %p99
    %p101 = scmp.ne.s32.totalorder %s90, %s91
    %p102 = scmp.eq.s32.totalorder %s14, 0
    %p103 = por %p101, %p102
    %p104 = scmp.ne.s32.totalorder %s90, %s91
    %p105 = scmp.eq.s32.totalorder %s15, 1
    %p106 = por %p104, %p105
    %p108 = scmp.ne.s32.totalorder %s91, %s107
    %p109 = scmp.eq.s32.totalorder %s15, 0
    %p110 = por %p108, %p109
    %p111 = scmp.le.s32.totalorder 1, %s9
    %p112 = scmp.lt.s32.totalorder %s9, 3
    %p113 = pnand %p111, %p112
    %p114 = pneg %p113
    // Predicated region
    $region9: #{tpu_custom_call.1} parent=5 // pred_check
      _
    $region10: #{tpu_custom_call.1} parent=5 // pred_check_branch
      %116 = sbr.rel (%p113) target = $region12
    $region11: #{tpu_custom_call.1} parent=5 // pred_region
      %s117 = ssub.s32 %s9, 1
      // Predicated region
      $region13: #{tpu_custom_call.1} parent=11 // pred_check
        %p118 = pneg %p56
      $region14: #{tpu_custom_call.1} parent=11 // pred_check_branch
        %120 = sbr.rel (%p118) target = $region16
      $region15: #{tpu_custom_call.1} parent=11 // pred_region
        _
      $region16: #{tpu_custom_call.1} parent=11 // pred_fallthru
        _
      // Predicated region
      $region17: #{tpu_custom_call.1} parent=11 // pred_check
        %p121 = pneg %p77
      $region18: #{tpu_custom_call.1} parent=11 // pred_check_branch
        %123 = sbr.rel (%p121) target = $region20
      $region19: #{tpu_custom_call.1} parent=11 // pred_region
        _
      $region20: #{tpu_custom_call.1} parent=11 // pred_fallthru
        _
    $region12: #{tpu_custom_call.1} parent=5 // pred_fallthru
      _
    %p124 = scmp.lt.s32.totalorder %s9, 2
    // Predicated region
    $region21: #{tpu_custom_call.1} parent=5 // pred_check
      %p125 = pneg %p124
    $region22: #{tpu_custom_call.1} parent=5 // pred_check_branch
      %127 = sbr.rel (%p125) target = $region24
    $region23: #{tpu_custom_call.1} parent=5 // pred_region
      // Predicated region
      $region25: #{tpu_custom_call.1} parent=23 // pred_check
        %p128 = pneg %p29
      $region26: #{tpu_custom_call.1} parent=23 // pred_check_branch
        %130 = sbr.rel (%p128) target = $region28
      $region27: #{tpu_custom_call.1} parent=23 // pred_region
        %s131 = smul.u32 64, %s9
        %p132 = scmp.lt.s32.totalorder %s131, 127
        %s133 = scalar_select %p132, %s131, 127
        %s134 = smul.addr %s133, 8
        %s135 = scalar_lea.vmem %s0, %s134
        %s136 = smul.u32 64, %s9
      $region28: #{tpu_custom_call.1} parent=23 // pred_fallthru
        _
    $region24: #{tpu_custom_call.1} parent=5 // pred_fallthru
      _
    %p137 = scmp.le.s32.totalorder 1, %s9
    %p138 = scmp.lt.s32.totalorder %s9, 3
    %p139 = pnand %p137, %p138
    %p140 = pneg %p139
    // Predicated region
    $region29: #{tpu_custom_call.1} parent=5 // pred_check
      _
    $region30: #{tpu_custom_call.1} parent=5 // pred_check_branch
      %142 = sbr.rel (%p139) target = $region32
    $region31: #{tpu_custom_call.1} parent=5 // pred_region
      %s143 = ssub.s32 %s9, 1
      %s144 = smul.u32 64, %s14
      %p145 = scmp.lt.s32.totalorder %s144, 127
      %s146 = scalar_select %p145, %s144, 127
      %s147 = smul.addr %s146, 8
      %s148 = scalar_lea.vmem %s0, %s147
      %p149 = pneg %p35
      %p150 = pneg %p32
      %p151 = pneg %p56
      %p152 = pneg %p53
      %p153 = pneg %p77
      %p154 = pneg %p74
      %p155 = pneg %p103
      %p156 = pneg %p100
      %s157 = smul.u32 64, %s14
      %p158 = scmp.lt.s32.totalorder %s157, 127
      %s159 = scalar_select %p158, %s157, 127
      %s160 = smul.addr %s159, 4
      %s161 = scalar_lea.vmem %s3, %s160
      %s162 = smul.u32 64, %s14
      %p163 = scmp.lt.s32.totalorder %s162, 127
      %s164 = scalar_select %p163, %s162, 127
      %s165 = smul.addr %s164, 8
      %s166 = scalar_lea.vmem %s0, %s165
      %s167 = smul.u32 64, %s14
      %s168 = smul.u32 64, %s14
      %p169 = scmp.lt.s32.totalorder %s168, 127
      %s170 = scalar_select %p169, %s168, 127
      %s171 = smul.addr %s170, 4
      %s172 = scalar_lea.vmem %s3, %s171
      %s173 = smul.u32 64, %s14
      %v175 = vld [vmem:[%s166] sm:$0xff]
      %v176 = vld [vmem:[%s166 + $0x8] sm:$0xff]
      %v177 = vld [vmem:[%s166 + $0x10] sm:$0xff]
      %v178 = vld [vmem:[%s166 + $0x18] sm:$0xff]
      %v179 = vld [vmem:[%s166 + $0x20] sm:$0xff]
      %v180 = vld [vmem:[%s166 + $0x28] sm:$0xff]
      %v181 = vld [vmem:[%s166 + $0x30] sm:$0xff]
      %v182 = vld [vmem:[%s166 + $0x38] sm:$0xff]
      %v183 = vld [vmem:[%s166 + $0x40] sm:$0xff]
      %v184 = vld [vmem:[%s166 + $0x48] sm:$0xff]
      %v185 = vld [vmem:[%s166 + $0x50] sm:$0xff]
      %v186 = vld [vmem:[%s166 + $0x58] sm:$0xff]
      %v187 = vld [vmem:[%s166 + $0x60] sm:$0xff]
      %v188 = vld [vmem:[%s166 + $0x68] sm:$0xff]
      %v189 = vld [vmem:[%s166 + $0x70] sm:$0xff]
      %v190 = vld [vmem:[%s166 + $0x78] sm:$0xff]
      %v191 = vld [vmem:[%s166 + $0x80] sm:$0xff]
      %v192 = vld [vmem:[%s166 + $0x88] sm:$0xff]
      %v193 = vld [vmem:[%s166 + $0x90] sm:$0xff]
      %v194 = vld [vmem:[%s166 + $0x98] sm:$0xff]
      %v195 = vld [vmem:[%s166 + $0xa0] sm:$0xff]
      %v196 = vld [vmem:[%s166 + $0xa8] sm:$0xff]
      %v197 = vld [vmem:[%s166 + $0xb0] sm:$0xff]
      %v198 = vld [vmem:[%s166 + $0xb8] sm:$0xff]
      %v199 = vld [vmem:[%s166 + $0xc0] sm:$0xff]
      %v200 = vld [vmem:[%s166 + $0xc8] sm:$0xff]
      %v201 = vld [vmem:[%s166 + $0xd0] sm:$0xff]
      %v202 = vld [vmem:[%s166 + $0xd8] sm:$0xff]
      %v203 = vld [vmem:[%s166 + $0xe0] sm:$0xff]
      %v204 = vld [vmem:[%s166 + $0xe8] sm:$0xff]
      %v205 = vld [vmem:[%s166 + $0xf0] sm:$0xff]
      %v206 = vld [vmem:[%s166 + $0xf8] sm:$0xff]
      %v207 = vld [vmem:[%s166 + $0x100] sm:$0xff]
      %v208 = vld [vmem:[%s166 + $0x108] sm:$0xff]
      %v209 = vld [vmem:[%s166 + $0x110] sm:$0xff]
      %v210 = vld [vmem:[%s166 + $0x118] sm:$0xff]
      %v211 = vld [vmem:[%s166 + $0x120] sm:$0xff]
      %v212 = vld [vmem:[%s166 + $0x128] sm:$0xff]
      %v213 = vld [vmem:[%s166 + $0x130] sm:$0xff]
      %v214 = vld [vmem:[%s166 + $0x138] sm:$0xff]
      %v215 = vld [vmem:[%s166 + $0x140] sm:$0xff]
      %v216 = vld [vmem:[%s166 + $0x148] sm:$0xff]
      %v217 = vld [vmem:[%s166 + $0x150] sm:$0xff]
      %v218 = vld [vmem:[%s166 + $0x158] sm:$0xff]
      %v219 = vld [vmem:[%s166 + $0x160] sm:$0xff]
      %v220 = vld [vmem:[%s166 + $0x168] sm:$0xff]
      %v221 = vld [vmem:[%s166 + $0x170] sm:$0xff]
      %v222 = vld [vmem:[%s166 + $0x178] sm:$0xff]
      %v223 = vld [vmem:[%s166 + $0x180] sm:$0xff]
      %v224 = vld [vmem:[%s166 + $0x188] sm:$0xff]
      %v225 = vld [vmem:[%s166 + $0x190] sm:$0xff]
      %v226 = vld [vmem:[%s166 + $0x198] sm:$0xff]
      %v227 = vld [vmem:[%s166 + $0x1a0] sm:$0xff]
      %v228 = vld [vmem:[%s166 + $0x1a8] sm:$0xff]
      %v229 = vld [vmem:[%s166 + $0x1b0] sm:$0xff]
      %v230 = vld [vmem:[%s166 + $0x1b8] sm:$0xff]
      %v231 = vld [vmem:[%s166 + $0x1c0] sm:$0xff]
      %v232 = vld [vmem:[%s166 + $0x1c8] sm:$0xff]
      %v233 = vld [vmem:[%s166 + $0x1d0] sm:$0xff]
      %v234 = vld [vmem:[%s166 + $0x1d8] sm:$0xff]
      %v235 = vld [vmem:[%s166 + $0x1e0] sm:$0xff]
      %v236 = vld [vmem:[%s166 + $0x1e8] sm:$0xff]
      %v237 = vld [vmem:[%s166 + $0x1f0] sm:$0xff]
      %v238 = vld [vmem:[%s166 + $0x1f8] sm:$0xff]
      %v239 = vpack.c.bf16 %v176, %v175
      %v240 = vpack.c.bf16 %v178, %v177
      %v241 = vpack.c.bf16 %v180, %v179
      %v242 = vpack.c.bf16 %v182, %v181
      %v243 = vpack.c.bf16 %v184, %v183
      %v244 = vpack.c.bf16 %v186, %v185
      %v245 = vpack.c.bf16 %v188, %v187
      %v246 = vpack.c.bf16 %v190, %v189
      %v247 = vpack.c.bf16 %v192, %v191
      %v248 = vpack.c.bf16 %v194, %v193
      %v249 = vpack.c.bf16 %v196, %v195
      %v250 = vpack.c.bf16 %v198, %v197
      %v251 = vpack.c.bf16 %v200, %v199
      %v252 = vpack.c.bf16 %v202, %v201
      %v253 = vpack.c.bf16 %v204, %v203
      %v254 = vpack.c.bf16 %v206, %v205
      %v255 = vpack.c.bf16 %v208, %v207
      %v256 = vpack.c.bf16 %v210, %v209
      %v257 = vpack.c.bf16 %v212, %v211
      %v258 = vpack.c.bf16 %v214, %v213
      %v259 = vpack.c.bf16 %v216, %v215
      %v260 = vpack.c.bf16 %v218, %v217
      %v261 = vpack.c.bf16 %v220, %v219
      %v262 = vpack.c.bf16 %v222, %v221
      %v263 = vpack.c.bf16 %v224, %v223
      %v264 = vpack.c.bf16 %v226, %v225
      %v265 = vpack.c.bf16 %v228, %v227
      %v266 = vpack.c.bf16 %v230, %v229
      %v267 = vpack.c.bf16 %v232, %v231
      %v268 = vpack.c.bf16 %v234, %v233
      %v269 = vpack.c.bf16 %v236, %v235
      %v270 = vpack.c.bf16 %v238, %v237
      %v271 = vld [vmem:[%s1] sm:$0xf]
      %v272 = vld [vmem:[%s1 + $0x4] sm:$0xf]
      %v273 = vld [vmem:[%s1 + $0x8] sm:$0xf]
      %v274 = vld [vmem:[%s1 + $0xc] sm:$0xf]
      %v275 = vld [vmem:[%s2] sm:$0x1]
      %v277 = vlaneseq
      %v278 = vshrl.u32 %v277, 7
      %v279 = vsub.s32 0, %v278
      %v280 = vrot.slane %v275, %v279
      %v286 = vunpack.c.l.b16 %v271
      %v287 = vunpack.c.l.b16 %v272
      %v288 = vunpack.c.l.b16 %v273
      %v289 = vunpack.c.l.b16 %v274
      %v290 = vpack.c.b16 %v287, %v286
      %v291 = vpack.c.b16 %v289, %v288
      %vm294 = vcmask 261120
      %v296 = vsel %vm294, %v239, 0
      %v299 = vsel %vm294, %v240, 0
      %v302 = vsel %vm294, %v241, 0
      %v305 = vsel %vm294, %v242, 0
      %v308 = vsel %vm294, %v243, 0
      %v311 = vsel %vm294, %v244, 0
      %v314 = vsel %vm294, %v245, 0
      %v317 = vsel %vm294, %v246, 0
      %v320 = vsel %vm294, %v247, 0
      %v323 = vsel %vm294, %v248, 0
      %v326 = vsel %vm294, %v249, 0
      %v329 = vsel %vm294, %v250, 0
      %v332 = vsel %vm294, %v251, 0
      %v335 = vsel %vm294, %v252, 0
      %v338 = vsel %vm294, %v253, 0
      %v341 = vsel %vm294, %v254, 0
      %v344 = vsel %vm294, %v255, 0
      %v347 = vsel %vm294, %v256, 0
      %v350 = vsel %vm294, %v257, 0
      %v353 = vsel %vm294, %v258, 0
      %v356 = vsel %vm294, %v259, 0
      %v359 = vsel %vm294, %v260, 0
      %v362 = vsel %vm294, %v261, 0
      %v365 = vsel %vm294, %v262, 0
      %v368 = vsel %vm294, %v263, 0
      %v371 = vsel %vm294, %v264, 0
      %v374 = vsel %vm294, %v265, 0
      %v377 = vsel %vm294, %v266, 0
      %v380 = vsel %vm294, %v267, 0
      %v383 = vsel %vm294, %v268, 0
      %v386 = vsel %vm294, %v269, 0
      %v389 = vsel %vm294, %v270, 0
      %391 = vmatprep.subr.bf16.mxu0 0
      %392 = vmatpush1.bf16.msra.mxu0 0
      %393 = vmatprep.subr.bf16.mxu0 0
      %394 = vmatpush1.bf16.msra.mxu0 0
      %395 = vmatprep.subr.bf16.mxu0 0
      %396 = vmatpush1.bf16.msra.mxu0 0
      %397 = vmatprep.subr.bf16.mxu0 0
      %398 = vmatpush1.bf16.msra.mxu0 0
      %399 = vmatprep.subr.bf16.mxu0 0
      %400 = vmatpush1.bf16.msra.mxu0 0
      %401 = vmatprep.subr.bf16.mxu0 0
      %402 = vmatpush1.bf16.msra.mxu0 0
      %403 = vmatprep.subr.bf16.mxu0 0
      %404 = vmatpush1.bf16.msra.mxu0 %v291
      %405 = vmatprep.subr.bf16.mxu0 0
      %406 = vmatpush1.bf16.msra.mxu0 %v290
      %407 = vmatprep.subr.bf16.mxu0 0
      %408 = vmatpush2.bf16.msra.mxu0 0
      %409 = vmatprep.subr.bf16.mxu0 0
      %410 = vmatpush2.bf16.msra.mxu0 0
      %411 = vmatprep.subr.bf16.mxu0 0
      %412 = vmatpush2.bf16.msra.mxu0 0
      %413 = vmatprep.subr.bf16.mxu0 0
      %414 = vmatpush2.bf16.msra.mxu0 0
      %415 = vmatprep.subr.bf16.mxu0 0
      %416 = vmatpush2.bf16.msra.mxu0 0
      %417 = vmatprep.subr.bf16.mxu0 0
      %418 = vmatpush2.bf16.msra.mxu0 0
      %419 = vmatprep.subr.bf16.mxu0 0
      %420 = vmatpush2.bf16.msra.mxu0 0
      %421 = vmatprep.subr.bf16.mxu0 0
      %422 = vmatpush2.bf16.msra.mxu0 0
      %423 = vmatprep.mubr.bf16.mxu0 0
      %424 = vmatmul.mubr.bf16.gmra.mxu0 %v296
      %v425 = vpop.f32.mrf.mxu0
      %v426 = vadd.f32 %v280, %v425
      %v427 = vpop.f32.mrf.mxu0
      %v428 = vpop.f32.mrf.mxu0
      %v429 = vadd.f32 %v280, %v428
      %v430 = vpop.f32.mrf.mxu0
      %431 = vmatprep.mubr.bf16.mxu0 0
      %432 = vmatmul.mubr.bf16.gmra.mxu0 %v299
      %v433 = vpop.f32.mrf.mxu0
      %v434 = vadd.f32 %v280, %v433
      %v435 = vpop.f32.mrf.mxu0
      %v436 = vpop.f32.mrf.mxu0
      %v437 = vadd.f32 %v280, %v436
      %v438 = vpop.f32.mrf.mxu0
      %439 = vmatprep.mubr.bf16.mxu0 0
      %440 = vmatmul.mubr.bf16.gmra.mxu0 %v302
      %v441 = vpop.f32.mrf.mxu0
      %v442 = vadd.f32 %v280, %v441
      %v443 = vpop.f32.mrf.mxu0
      %v444 = vpop.f32.mrf.mxu0
      %v445 = vadd.f32 %v280, %v444
      %v446 = vpop.f32.mrf.mxu0
      %447 = vmatprep.mubr.bf16.mxu0 0
      %448 = vmatmul.mubr.bf16.gmra.mxu0 %v305
      %v449 = vpop.f32.mrf.mxu0
      %v450 = vadd.f32 %v280, %v449
      %v451 = vpop.f32.mrf.mxu0
      %v452 = vpop.f32.mrf.mxu0
      %v453 = vadd.f32 %v280, %v452
      %v454 = vpop.f32.mrf.mxu0
      %455 = vmatprep.mubr.bf16.mxu0 0
      %456 = vmatmul.mubr.bf16.gmra.mxu0 %v308
      %v457 = vpop.f32.mrf.mxu0
      %v458 = vadd.f32 %v280, %v457
      %v459 = vpop.f32.mrf.mxu0
      %v460 = vpop.f32.mrf.mxu0
      %v461 = vadd.f32 %v280, %v460
      %v462 = vpop.f32.mrf.mxu0
      %463 = vmatprep.mubr.bf16.mxu0 0
      %464 = vmatmul.mubr.bf16.gmra.mxu0 %v311
      %v465 = vpop.f32.mrf.mxu0
      %v466 = vadd.f32 %v280, %v465
      %v467 = vpop.f32.mrf.mxu0
      %v468 = vpop.f32.mrf.mxu0
      %v469 = vadd.f32 %v280, %v468
      %v470 = vpop.f32.mrf.mxu0
      %471 = vmatprep.mubr.bf16.mxu0 0
      %472 = vmatmul.mubr.bf16.gmra.mxu0 %v314
      %v473 = vpop.f32.mrf.mxu0
      %v474 = vadd.f32 %v280, %v473
      %v475 = vpop.f32.mrf.mxu0
      %v476 = vpop.f32.mrf.mxu0
      %v477 = vadd.f32 %v280, %v476
      %v478 = vpop.f32.mrf.mxu0
      %479 = vmatprep.mubr.bf16.mxu0 0
      %480 = vmatmul.mubr.bf16.gmra.mxu0 %v317
      %v481 = vpop.f32.mrf.mxu0
      %v482 = vadd.f32 %v280, %v481
      %v483 = vpop.f32.mrf.mxu0
      %v484 = vpop.f32.mrf.mxu0
      %v485 = vadd.f32 %v280, %v484
      %v486 = vpop.f32.mrf.mxu0
      %487 = vmatprep.mubr.bf16.mxu0 0
      %488 = vmatmul.mubr.bf16.gmra.mxu0 %v320
      %v489 = vpop.f32.mrf.mxu0
      %v490 = vadd.f32 %v280, %v489
      %v491 = vpop.f32.mrf.mxu0
      %v492 = vpop.f32.mrf.mxu0
      %v493 = vadd.f32 %v280, %v492
      %v494 = vpop.f32.mrf.mxu0
      %495 = vmatprep.mubr.bf16.mxu0 0
      %496 = vmatmul.mubr.bf16.gmra.mxu0 %v323
      %v497 = vpop.f32.mrf.mxu0
      %v498 = vadd.f32 %v280, %v497
      %v499 = vpop.f32.mrf.mxu0
      %v500 = vpop.f32.mrf.mxu0
      %v501 = vadd.f32 %v280, %v500
      %v502 = vpop.f32.mrf.mxu0
      %503 = vmatprep.mubr.bf16.mxu0 0
      %504 = vmatmul.mubr.bf16.gmra.mxu0 %v326
      %v505 = vpop.f32.mrf.mxu0
      %v506 = vadd.f32 %v280, %v505
      %v507 = vpop.f32.mrf.mxu0
      %v508 = vpop.f32.mrf.mxu0
      %v509 = vadd.f32 %v280, %v508
      %v510 = vpop.f32.mrf.mxu0
      %511 = vmatprep.mubr.bf16.mxu0 0
      %512 = vmatmul.mubr.bf16.gmra.mxu0 %v329
      %v513 = vpop.f32.mrf.mxu0
      %v514 = vadd.f32 %v280, %v513
      %v515 = vpop.f32.mrf.mxu0
      %v516 = vpop.f32.mrf.mxu0
      %v517 = vadd.f32 %v280, %v516
      %v518 = vpop.f32.mrf.mxu0
      %519 = vmatprep.mubr.bf16.mxu0 0
      %520 = vmatmul.mubr.bf16.gmra.mxu0 %v332
      %v521 = vpop.f32.mrf.mxu0
      %v522 = vadd.f32 %v280, %v521
      %v523 = vpop.f32.mrf.mxu0
      %v524 = vpop.f32.mrf.mxu0
      %v525 = vadd.f32 %v280, %v524
      %v526 = vpop.f32.mrf.mxu0
      %527 = vmatprep.mubr.bf16.mxu0 0
      %528 = vmatmul.mubr.bf16.gmra.mxu0 %v335
      %v529 = vpop.f32.mrf.mxu0
      %v530 = vadd.f32 %v280, %v529
      %v531 = vpop.f32.mrf.mxu0
      %v532 = vpop.f32.mrf.mxu0
      %v533 = vadd.f32 %v280, %v532
      %v534 = vpop.f32.mrf.mxu0
      %535 = vmatprep.mubr.bf16.mxu0 0
      %536 = vmatmul.mubr.bf16.gmra.mxu0 %v338
      %v537 = vpop.f32.mrf.mxu0
      %v538 = vadd.f32 %v280, %v537
      %v539 = vpop.f32.mrf.mxu0
      %v540 = vpop.f32.mrf.mxu0
      %v541 = vadd.f32 %v280, %v540
      %v542 = vpop.f32.mrf.mxu0
      %543 = vmatprep.mubr.bf16.mxu0 0
      %544 = vmatmul.mubr.bf16.gmra.mxu0 %v341
      %v545 = vpop.f32.mrf.mxu0
      %v546 = vadd.f32 %v280, %v545
      %v547 = vpop.f32.mrf.mxu0
      %v548 = vpop.f32.mrf.mxu0
      %v549 = vadd.f32 %v280, %v548
      %v550 = vpop.f32.mrf.mxu0
      %551 = vmatprep.mubr.bf16.mxu0 0
      %552 = vmatmul.mubr.bf16.gmra.mxu0 %v344
      %v553 = vpop.f32.mrf.mxu0
      %v554 = vadd.f32 %v280, %v553
      %v555 = vpop.f32.mrf.mxu0
      %v556 = vpop.f32.mrf.mxu0
      %v557 = vadd.f32 %v280, %v556
      %v558 = vpop.f32.mrf.mxu0
      %559 = vmatprep.mubr.bf16.mxu0 0
      %560 = vmatmul.mubr.bf16.gmra.mxu0 %v347
      %v561 = vpop.f32.mrf.mxu0
      %v562 = vadd.f32 %v280, %v561
      %v563 = vpop.f32.mrf.mxu0
      %v564 = vpop.f32.mrf.mxu0
      %v565 = vadd.f32 %v280, %v564
      %v566 = vpop.f32.mrf.mxu0
      %567 = vmatprep.mubr.bf16.mxu0 0
      %568 = vmatmul.mubr.bf16.gmra.mxu0 %v350
      %v569 = vpop.f32.mrf.mxu0
      %v570 = vadd.f32 %v280, %v569
      %v571 = vpop.f32.mrf.mxu0
      %v572 = vpop.f32.mrf.mxu0
      %v573 = vadd.f32 %v280, %v572
      %v574 = vpop.f32.mrf.mxu0
      %575 = vmatprep.mubr.bf16.mxu0 0
      %576 = vmatmul.mubr.bf16.gmra.mxu0 %v353
      %v577 = vpop.f32.mrf.mxu0
      %v578 = vadd.f32 %v280, %v577
      %v579 = vpop.f32.mrf.mxu0
      %v580 = vpop.f32.mrf.mxu0
      %v581 = vadd.f32 %v280, %v580
      %v582 = vpop.f32.mrf.mxu0
      %583 = vmatprep.mubr.bf16.mxu0 0
      %584 = vmatmul.mubr.bf16.gmra.mxu0 %v356
      %v585 = vpop.f32.mrf.mxu0
      %v586 = vadd.f32 %v280, %v585
      %v587 = vpop.f32.mrf.mxu0
      %v588 = vpop.f32.mrf.mxu0
      %v589 = vadd.f32 %v280, %v588
      %v590 = vpop.f32.mrf.mxu0
      %591 = vmatprep.mubr.bf16.mxu0 0
      %592 = vmatmul.mubr.bf16.gmra.mxu0 %v359
      %v593 = vpop.f32.mrf.mxu0
      %v594 = vadd.f32 %v280, %v593
      %v595 = vpop.f32.mrf.mxu0
      %v596 = vpop.f32.mrf.mxu0
      %v597 = vadd.f32 %v280, %v596
      %v598 = vpop.f32.mrf.mxu0
      %599 = vmatprep.mubr.bf16.mxu0 0
      %600 = vmatmul.mubr.bf16.gmra.mxu0 %v362
      %v601 = vpop.f32.mrf.mxu0
      %v602 = vadd.f32 %v280, %v601
      %v603 = vpop.f32.mrf.mxu0
      %v604 = vpop.f32.mrf.mxu0
      %v605 = vadd.f32 %v280, %v604
      %v606 = vpop.f32.mrf.mxu0
      %607 = vmatprep.mubr.bf16.mxu0 0
      %608 = vmatmul.mubr.bf16.gmra.mxu0 %v365
      %v609 = vpop.f32.mrf.mxu0
      %v610 = vadd.f32 %v280, %v609
      %v611 = vpop.f32.mrf.mxu0
      %v612 = vpop.f32.mrf.mxu0
      %v613 = vadd.f32 %v280, %v612
      %v614 = vpop.f32.mrf.mxu0
      %615 = vmatprep.mubr.bf16.mxu0 0
      %616 = vmatmul.mubr.bf16.gmra.mxu0 %v368
      %v617 = vpop.f32.mrf.mxu0
      %v618 = vadd.f32 %v280, %v617
      %v619 = vpop.f32.mrf.mxu0
      %v620 = vpop.f32.mrf.mxu0
      %v621 = vadd.f32 %v280, %v620
      %v622 = vpop.f32.mrf.mxu0
      %623 = vmatprep.mubr.bf16.mxu0 0
      %624 = vmatmul.mubr.bf16.gmra.mxu0 %v371
      %v625 = vpop.f32.mrf.mxu0
      %v626 = vadd.f32 %v280, %v625
      %v627 = vpop.f32.mrf.mxu0
      %v628 = vpop.f32.mrf.mxu0
      %v629 = vadd.f32 %v280, %v628
      %v630 = vpop.f32.mrf.mxu0
      %631 = vmatprep.mubr.bf16.mxu0 0
      %632 = vmatmul.mubr.bf16.gmra.mxu0 %v374
      %v633 = vpop.f32.mrf.mxu0
      %v634 = vadd.f32 %v280, %v633
      %v635 = vpop.f32.mrf.mxu0
      %v636 = vpop.f32.mrf.mxu0
      %v637 = vadd.f32 %v280, %v636
      %v638 = vpop.f32.mrf.mxu0
      %639 = vmatprep.mubr.bf16.mxu0 0
      %640 = vmatmul.mubr.bf16.gmra.mxu0 %v377
      %v641 = vpop.f32.mrf.mxu0
      %v642 = vadd.f32 %v280, %v641
      %v643 = vpop.f32.mrf.mxu0
      %v644 = vpop.f32.mrf.mxu0
      %v645 = vadd.f32 %v280, %v644
      %v646 = vpop.f32.mrf.mxu0
      %647 = vmatprep.mubr.bf16.mxu0 0
      %648 = vmatmul.mubr.bf16.gmra.mxu0 %v380
      %v649 = vpop.f32.mrf.mxu0
      %v650 = vadd.f32 %v280, %v649
      %v651 = vpop.f32.mrf.mxu0
      %v652 = vpop.f32.mrf.mxu0
      %v653 = vadd.f32 %v280, %v652
      %v654 = vpop.f32.mrf.mxu0
      %655 = vmatprep.mubr.bf16.mxu0 0
      %656 = vmatmul.mubr.bf16.gmra.mxu0 %v383
      %v657 = vpop.f32.mrf.mxu0
      %v658 = vadd.f32 %v280, %v657
      %v659 = vpop.f32.mrf.mxu0
      %v660 = vpop.f32.mrf.mxu0
      %v661 = vadd.f32 %v280, %v660
      %v662 = vpop.f32.mrf.mxu0
      %663 = vmatprep.mubr.bf16.mxu0 0
      %664 = vmatmul.mubr.bf16.gmra.mxu0 %v386
      %v665 = vpop.f32.mrf.mxu0
      %v666 = vadd.f32 %v280, %v665
      %v667 = vpop.f32.mrf.mxu0
      %v668 = vpop.f32.mrf.mxu0
      %v669 = vadd.f32 %v280, %v668
      %v670 = vpop.f32.mrf.mxu0
      %671 = vmatprep.mubr.bf16.mxu0 0
      %672 = vmatmul.mubr.bf16.gmra.mxu0 %v389
      %v673 = vpop.f32.mrf.mxu0
      %v674 = vadd.f32 %v280, %v673
      %v675 = vpop.f32.mrf.mxu0
      %v676 = vpop.f32.mrf.mxu0
      %v677 = vadd.f32 %v280, %v676
      %v678 = vpop.f32.mrf.mxu0
      %679 = vdwg.mxu0
      %v680 = vpack.c.bf16 %v429, %v426
      %v681 = vpack.c.bf16 %v437, %v434
      %v682 = vpack.c.bf16 %v445, %v442
      %v683 = vpack.c.bf16 %v453, %v450
      %v684 = vpack.c.bf16 %v461, %v458
      %v685 = vpack.c.bf16 %v469, %v466
      %v686 = vpack.c.bf16 %v477, %v474
      %v687 = vpack.c.bf16 %v485, %v482
      %v688 = vpack.c.bf16 %v493, %v490
      %v689 = vpack.c.bf16 %v501, %v498
      %v690 = vpack.c.bf16 %v509, %v506
      %v691 = vpack.c.bf16 %v517, %v514
      %v692 = vpack.c.bf16 %v525, %v522
      %v693 = vpack.c.bf16 %v533, %v530
      %v694 = vpack.c.bf16 %v541, %v538
      %v695 = vpack.c.bf16 %v549, %v546
      %v696 = vpack.c.bf16 %v557, %v554
      %v697 = vpack.c.bf16 %v565, %v562
      %v698 = vpack.c.bf16 %v573, %v570
      %v699 = vpack.c.bf16 %v581, %v578
      %v700 = vpack.c.bf16 %v589, %v586
      %v701 = vpack.c.bf16 %v597, %v594
      %v702 = vpack.c.bf16 %v605, %v602
      %v703 = vpack.c.bf16 %v613, %v610
      %v704 = vpack.c.bf16 %v621, %v618
      %v705 = vpack.c.bf16 %v629, %v626
      %v706 = vpack.c.bf16 %v637, %v634
      %v707 = vpack.c.bf16 %v645, %v642
      %v708 = vpack.c.bf16 %v653, %v650
      %v709 = vpack.c.bf16 %v661, %v658
      %v710 = vpack.c.bf16 %v669, %v666
      %v711 = vpack.c.bf16 %v677, %v674
      %v744 = vunpack.c.l.b16 %v680
      %v745 = vunpack.c.h.b16 %v680
      %v746 = vunpack.c.l.b16 %v681
      %v747 = vunpack.c.h.b16 %v681
      %v748 = vunpack.c.l.b16 %v682
      %v749 = vunpack.c.h.b16 %v682
      %v750 = vunpack.c.l.b16 %v683
      %v751 = vunpack.c.h.b16 %v683
      %v752 = vunpack.c.l.b16 %v684
      %v753 = vunpack.c.h.b16 %v684
      %v754 = vunpack.c.l.b16 %v685
      %v755 = vunpack.c.h.b16 %v685
      %v756 = vunpack.c.l.b16 %v686
      %v757 = vunpack.c.h.b16 %v686
      %v758 = vunpack.c.l.b16 %v687
      %v759 = vunpack.c.h.b16 %v687
      %v760 = vunpack.c.l.b16 %v688
      %v761 = vunpack.c.h.b16 %v688
      %v762 = vunpack.c.l.b16 %v689
      %v763 = vunpack.c.h.b16 %v689
      %v764 = vunpack.c.l.b16 %v690
      %v765 = vunpack.c.h.b16 %v690
      %v766 = vunpack.c.l.b16 %v691
      %v767 = vunpack.c.h.b16 %v691
      %v768 = vunpack.c.l.b16 %v692
      %v769 = vunpack.c.h.b16 %v692
      %v770 = vunpack.c.l.b16 %v693
      %v771 = vunpack.c.h.b16 %v693
      %v772 = vunpack.c.l.b16 %v694
      %v773 = vunpack.c.h.b16 %v694
      %v774 = vunpack.c.l.b16 %v695
      %v775 = vunpack.c.h.b16 %v695
      %v776 = vunpack.c.l.b16 %v696
      %v777 = vunpack.c.h.b16 %v696
      %v778 = vunpack.c.l.b16 %v697
      %v779 = vunpack.c.h.b16 %v697
      %v780 = vunpack.c.l.b16 %v698
      %v781 = vunpack.c.h.b16 %v698
      %v782 = vunpack.c.l.b16 %v699
      %v783 = vunpack.c.h.b16 %v699
      %v784 = vunpack.c.l.b16 %v700
      %v785 = vunpack.c.h.b16 %v700
      %v786 = vunpack.c.l.b16 %v701
      %v787 = vunpack.c.h.b16 %v701
      %v788 = vunpack.c.l.b16 %v702
      %v789 = vunpack.c.h.b16 %v702
      %v790 = vunpack.c.l.b16 %v703
      %v791 = vunpack.c.h.b16 %v703
      %v792 = vunpack.c.l.b16 %v704
      %v793 = vunpack.c.h.b16 %v704
      %v794 = vunpack.c.l.b16 %v705
      %v795 = vunpack.c.h.b16 %v705
      %v796 = vunpack.c.l.b16 %v706
      %v797 = vunpack.c.h.b16 %v706
      %v798 = vunpack.c.l.b16 %v707
      %v799 = vunpack.c.h.b16 %v707
      %v800 = vunpack.c.l.b16 %v708
      %v801 = vunpack.c.h.b16 %v708
      %v802 = vunpack.c.l.b16 %v709
      %v803 = vunpack.c.h.b16 %v709
      %v804 = vunpack.c.l.b16 %v710
      %v805 = vunpack.c.h.b16 %v710
      %v806 = vunpack.c.l.b16 %v711
      %v807 = vunpack.c.h.b16 %v711
      %v808 = vpack.c.b16 %v744, %v744
      %v809 = vpack.c.b16 %v745, %v745
      %v810 = vpack.c.b16 %v746, %v746
      %v811 = vpack.c.b16 %v747, %v747
      %v812 = vpack.c.b16 %v748, %v748
      %v813 = vpack.c.b16 %v749, %v749
      %v814 = vpack.c.b16 %v750, %v750
      %v815 = vpack.c.b16 %v751, %v751
      %v816 = vpack.c.b16 %v752, %v752
      %v817 = vpack.c.b16 %v753, %v753
      %v818 = vpack.c.b16 %v754, %v754
      %v819 = vpack.c.b16 %v755, %v755
      %v820 = vpack.c.b16 %v756, %v756
      %v821 = vpack.c.b16 %v757, %v757
      %v822 = vpack.c.b16 %v758, %v758
      %v823 = vpack.c.b16 %v759, %v759
      %v824 = vpack.c.b16 %v760, %v760
      %v825 = vpack.c.b16 %v761, %v761
      %v826 = vpack.c.b16 %v762, %v762
      %v827 = vpack.c.b16 %v763, %v763
      %v828 = vpack.c.b16 %v764, %v764
      %v829 = vpack.c.b16 %v765, %v765
      %v830 = vpack.c.b16 %v766, %v766
      %v831 = vpack.c.b16 %v767, %v767
      %v832 = vpack.c.b16 %v768, %v768
      %v833 = vpack.c.b16 %v769, %v769
      %v834 = vpack.c.b16 %v770, %v770
      %v835 = vpack.c.b16 %v771, %v771
      %v836 = vpack.c.b16 %v772, %v772
      %v837 = vpack.c.b16 %v773, %v773
      %v838 = vpack.c.b16 %v774, %v774
      %v839 = vpack.c.b16 %v775, %v775
      %v840 = vpack.c.b16 %v776, %v776
      %v841 = vpack.c.b16 %v777, %v777
      %v842 = vpack.c.b16 %v778, %v778
      %v843 = vpack.c.b16 %v779, %v779
      %v844 = vpack.c.b16 %v780, %v780
      %v845 = vpack.c.b16 %v781, %v781
      %v846 = vpack.c.b16 %v782, %v782
      %v847 = vpack.c.b16 %v783, %v783
      %v848 = vpack.c.b16 %v784, %v784
      %v849 = vpack.c.b16 %v785, %v785
      %v850 = vpack.c.b16 %v786, %v786
      %v851 = vpack.c.b16 %v787, %v787
      %v852 = vpack.c.b16 %v788, %v788
      %v853 = vpack.c.b16 %v789, %v789
      %v854 = vpack.c.b16 %v790, %v790
      %v855 = vpack.c.b16 %v791, %v791
      %v856 = vpack.c.b16 %v792, %v792
      %v857 = vpack.c.b16 %v793, %v793
      %v858 = vpack.c.b16 %v794, %v794
      %v859 = vpack.c.b16 %v795, %v795
      %v860 = vpack.c.b16 %v796, %v796
      %v861 = vpack.c.b16 %v797, %v797
      %v862 = vpack.c.b16 %v798, %v798
      %v863 = vpack.c.b16 %v799, %v799
      %v864 = vpack.c.b16 %v800, %v800
      %v865 = vpack.c.b16 %v801, %v801
      %v866 = vpack.c.b16 %v802, %v802
      %v867 = vpack.c.b16 %v803, %v803
      %v868 = vpack.c.b16 %v804, %v804
      %v869 = vpack.c.b16 %v805, %v805
      %v870 = vpack.c.b16 %v806, %v806
      %v871 = vpack.c.b16 %v807, %v807
      %vm936 = vcmask 781312
      %937 = vst.msk [vmem:[%s172] sm:$0xf] %vm936, %v808
      %938 = vst.msk [vmem:[%s172 + $0x4] sm:$0xf] %vm936, %v809
      %939 = vst.msk [vmem:[%s172 + $0x8] sm:$0xf] %vm936, %v810
      %940 = vst.msk [vmem:[%s172 + $0xc] sm:$0xf] %vm936, %v811
      %941 = vst.msk [vmem:[%s172 + $0x10] sm:$0xf] %vm936, %v812
      %942 = vst.msk [vmem:[%s172 + $0x14] sm:$0xf] %vm936, %v813
      %943 = vst.msk [vmem:[%s172 + $0x18] sm:$0xf] %vm936, %v814
      %944 = vst.msk [vmem:[%s172 + $0x1c] sm:$0xf] %vm936, %v815
      %945 = vst.msk [vmem:[%s172 + $0x20] sm:$0xf] %vm936, %v816
      %946 = vst.msk [vmem:[%s172 + $0x24] sm:$0xf] %vm936, %v817
      %947 = vst.msk [vmem:[%s172 + $0x28] sm:$0xf] %vm936, %v818
      %948 = vst.msk [vmem:[%s172 + $0x2c] sm:$0xf] %vm936, %v819
      %949 = vst.msk [vmem:[%s172 + $0x30] sm:$0xf] %vm936, %v820
      %950 = vst.msk [vmem:[%s172 + $0x34] sm:$0xf] %vm936, %v821
      %951 = vst.msk [vmem:[%s172 + $0x38] sm:$0xf] %vm936, %v822
      %952 = vst.msk [vmem:[%s172 + $0x3c] sm:$0xf] %vm936, %v823
      %953 = vst.msk [vmem:[%s172 + $0x40] sm:$0xf] %vm936, %v824
      %954 = vst.msk [vmem:[%s172 + $0x44] sm:$0xf] %vm936, %v825
      %955 = vst.msk [vmem:[%s172 + $0x48] sm:$0xf] %vm936, %v826
      %956 = vst.msk [vmem:[%s172 + $0x4c] sm:$0xf] %vm936, %v827
      %957 = vst.msk [vmem:[%s172 + $0x50] sm:$0xf] %vm936, %v828
      %958 = vst.msk [vmem:[%s172 + $0x54] sm:$0xf] %vm936, %v829
      %959 = vst.msk [vmem:[%s172 + $0x58] sm:$0xf] %vm936, %v830
      %960 = vst.msk [vmem:[%s172 + $0x5c] sm:$0xf] %vm936, %v831
      %961 = vst.msk [vmem:[%s172 + $0x60] sm:$0xf] %vm936, %v832
      %962 = vst.msk [vmem:[%s172 + $0x64] sm:$0xf] %vm936, %v833
      %963 = vst.msk [vmem:[%s172 + $0x68] sm:$0xf] %vm936, %v834
      %964 = vst.msk [vmem:[%s172 + $0x6c] sm:$0xf] %vm936, %v835
      %965 = vst.msk [vmem:[%s172 + $0x70] sm:$0xf] %vm936, %v836
      %966 = vst.msk [vmem:[%s172 + $0x74] sm:$0xf] %vm936, %v837
      %967 = vst.msk [vmem:[%s172 + $0x78] sm:$0xf] %vm936, %v838
      %968 = vst.msk [vmem:[%s172 + $0x7c] sm:$0xf] %vm936, %v839
      %969 = vst.msk [vmem:[%s172 + $0x80] sm:$0xf] %vm936, %v840
      %970 = vst.msk [vmem:[%s172 + $0x84] sm:$0xf] %vm936, %v841
      %971 = vst.msk [vmem:[%s172 + $0x88] sm:$0xf] %vm936, %v842
      %972 = vst.msk [vmem:[%s172 + $0x8c] sm:$0xf] %vm936, %v843
      %973 = vst.msk [vmem:[%s172 + $0x90] sm:$0xf] %vm936, %v844
      %974 = vst.msk [vmem:[%s172 + $0x94] sm:$0xf] %vm936, %v845
      %975 = vst.msk [vmem:[%s172 + $0x98] sm:$0xf] %vm936, %v846
      %976 = vst.msk [vmem:[%s172 + $0x9c] sm:$0xf] %vm936, %v847
      %977 = vst.msk [vmem:[%s172 + $0xa0] sm:$0xf] %vm936, %v848
      %978 = vst.msk [vmem:[%s172 + $0xa4] sm:$0xf] %vm936, %v849
      %979 = vst.msk [vmem:[%s172 + $0xa8] sm:$0xf] %vm936, %v850
      %980 = vst.msk [vmem:[%s172 + $0xac] sm:$0xf] %vm936, %v851
      %981 = vst.msk [vmem:[%s172 + $0xb0] sm:$0xf] %vm936, %v852
      %982 = vst.msk [vmem:[%s172 + $0xb4] sm:$0xf] %vm936, %v853
      %983 = vst.msk [vmem:[%s172 + $0xb8] sm:$0xf] %vm936, %v854
      %984 = vst.msk [vmem:[%s172 + $0xbc] sm:$0xf] %vm936, %v855
      %985 = vst.msk [vmem:[%s172 + $0xc0] sm:$0xf] %vm936, %v856
      %986 = vst.msk [vmem:[%s172 + $0xc4] sm:$0xf] %vm936, %v857
      %987 = vst.msk [vmem:[%s172 + $0xc8] sm:$0xf] %vm936, %v858
      %988 = vst.msk [vmem:[%s172 + $0xcc] sm:$0xf] %vm936, %v859
      %989 = vst.msk [vmem:[%s172 + $0xd0] sm:$0xf] %vm936, %v860
      %990 = vst.msk [vmem:[%s172 + $0xd4] sm:$0xf] %vm936, %v861
      %991 = vst.msk [vmem:[%s172 + $0xd8] sm:$0xf] %vm936, %v862
      %992 = vst.msk [vmem:[%s172 + $0xdc] sm:$0xf] %vm936, %v863
      %993 = vst.msk [vmem:[%s172 + $0xe0] sm:$0xf] %vm936, %v864
      %994 = vst.msk [vmem:[%s172 + $0xe4] sm:$0xf] %vm936, %v865
      %995 = vst.msk [vmem:[%s172 + $0xe8] sm:$0xf] %vm936, %v866
      %996 = vst.msk [vmem:[%s172 + $0xec] sm:$0xf] %vm936, %v867
      %997 = vst.msk [vmem:[%s172 + $0xf0] sm:$0xf] %vm936, %v868
      %998 = vst.msk [vmem:[%s172 + $0xf4] sm:$0xf] %vm936, %v869
      %999 = vst.msk [vmem:[%s172 + $0xf8] sm:$0xf] %vm936, %v870
      %1000 = vst.msk [vmem:[%s172 + $0xfc] sm:$0xf] %vm936, %v871
      %s1001 = smul.u32 64, %s14
      %p1002 = scmp.lt.s32.totalorder %s1001, 127
      %s1003 = scalar_select %p1002, %s1001, 127
      %s1004 = smul.addr %s1003, 4
      %s1005 = scalar_lea.vmem %s3, %s1004
      // Predicated region
      $region33: #{tpu_custom_call.1} parent=31 // pred_check
        %p1006 = pneg %p100
      $region34: #{tpu_custom_call.1} parent=31 // pred_check_branch
        %1008 = sbr.rel (%p1006) target = $region36
      $region35: #{tpu_custom_call.1} parent=31 // pred_region
        %s1009 = smul.u32 64, %s14
      $region36: #{tpu_custom_call.1} parent=31 // pred_fallthru
        _
    $region32: #{tpu_custom_call.1} parent=5 // pred_fallthru
      _
    %p1010 = scmp.le.s32.totalorder 2, %s9
    // Predicated region
    $region37: #{tpu_custom_call.1} parent=5 // pred_check
      %p1011 = pneg %p1010
    $region38: #{tpu_custom_call.1} parent=5 // pred_check_branch
      %1013 = sbr.rel (%p1011) target = $region40
    $region39: #{tpu_custom_call.1} parent=5 // pred_region
      %s1014 = ssub.s32 %s9, 2
      // Predicated region
      $region41: #{tpu_custom_call.1} parent=39 // pred_check
        %p1015 = pneg %p106
      $region42: #{tpu_custom_call.1} parent=39 // pred_check_branch
        %1017 = sbr.rel (%p1015) target = $region44
      $region43: #{tpu_custom_call.1} parent=39 // pred_region
        %s1018 = smul.u32 64, %s15
        %p1019 = scmp.lt.s32.totalorder %s1018, 127
        %s1020 = scalar_select %p1019, %s1018, 127
        %s1021 = smul.addr %s1020, 4
        %s1022 = scalar_lea.vmem %s3, %s1021
      $region44: #{tpu_custom_call.1} parent=39 // pred_fallthru
        _
    $region40: #{tpu_custom_call.1} parent=5 // pred_fallthru
      _
  $region6: #{tpu_custom_call.1} parent=0 // loop_footer
    %s13 = sadd.s32 1, %s9
  $region7: #{tpu_custom_call.1} parent=0 // loop_footer_branch
    %8 = sbr.rel target = $region3
  $region8: #{tpu_custom_call.1} parent=0 // loop_exit
    _

</llo_original>
